<compile_context>
chip_gen: v5e
topology: v5e:2x2
jax: 0.10.0
libtpu: 0.0.40
codegen_flags: <defaults>
</compile_context>

<pallas_src>
import functools

import jax
import jax.numpy as jnp
import numpy as np
from jax import lax
from jax.experimental import pallas as pl
from jax.experimental.pallas import tpu as pltpu

NUM = 5            # number of grid intervals (pykan default)
K = 3              # cubic B-spline degree (pykan default)
M = NUM + K        # number of B-spline basis functions per scalar input


def _make_grid(grid_range):
    """Extended uniform knot vector of length NUM + 2K + 1 (python floats)."""
    a, b = float(grid_range[0]), float(grid_range[1])
    h = (b - a) / NUM
    return tuple(a + (i - K) * h for i in range(NUM + 2 * K + 1)), h


def _default_basis_dtype():
    """bf16 basis math on chips with bf16 VALUs (v6e/v7x); f32 otherwise."""
    try:
        kind = jax.devices()[0].device_kind.lower()
    except Exception:
        return jnp.float32
    if any(tok in kind for tok in ("v6", "v7", "6e", "7x")):
        return jnp.bfloat16
    return jnp.float32


def _chunk_rows(din, basis_dtype):
    """Input rows handled per inner-loop step (bounds vreg live ranges)."""
    pack = 16 if basis_dtype == jnp.bfloat16 else 8
    if din % pack == 0:
        return pack
    if din % 8 == 0:
        return 8
    return din          # tiny/odd width: single static chunk


def _kan_fwd_kernel(*refs, widths, grid_pts, degree, basis_dtype):
    """Fused forward over all KAN layers for one (width[0], bn) batch tile.

    refs = (x_ref, w_ref_0..w_ref_{L-1}, out_ref_0..out_ref_{L-1}, slab_ref)

    Per layer l (Din = widths[l], Dout = widths[l+1]), for each Din-chunk:
      slab[r0:r0+ch]              = silu(x_chunk)           (base path)
      slab[(m+1)Din+r0 : +ch]     = U_m(x_chunk), m=0..M-1  (spline path)
    then one MXU matmul  y = W_l @ slab[0:(M+1)Din]  with f32 accumulation.
    U_m is the *unnormalised* uniform-knot cubic B-spline (U = B * K! h^K);
    the constant is pre-folded into the packed weights.
    """
    L = len(widths) - 1
    x_ref = refs[0]
    w_refs = refs[1:1 + L]
    out_refs = refs[1 + L:1 + 2 * L]
    slab = refs[1 + 2 * L]

    n_knots = len(grid_pts)

    for l in range(L):
        din = widths[l]
        rows = (M + 1) * din
        in_ref = x_ref if l == 0 else out_refs[l - 1]
        ch = _chunk_rows(din, basis_dtype)
        n_chunks = din // ch

        def chunk_body(c, carry, in_ref=in_ref, din=din, ch=ch):
            r0 = c * ch
            if not isinstance(r0, int):
                r0 = pl.multiple_of(r0, ch)
            xc = in_ref[pl.ds(r0, ch), :].astype(basis_dtype)      # (ch, bn)

            # ---- base path: SiLU(x) into slab rows [r0, r0+ch) ----
            slab[pl.ds(r0, ch), :] = (xc * jax.nn.sigmoid(xc)).astype(slab.dtype)

            # ---- degree-0 bases: step functions -> adjacent differences ----
            f = [(xc >= g).astype(basis_dtype) for g in grid_pts]
            b = [f[i] - f[i + 1] for i in range(n_knots - 1)]

            # ---- division-free Cox-de Boor on uniform knots ----
            # U_{i,d} = (x - g[i]) U_{i,d-1} - (x - g[i+d+1]) U_{i+1,d-1}
            t = [xc - g for g in grid_pts]
            for d in range(1, degree + 1):
                b = [t[i] * b[i] - t[i + d + 1] * b[i + 1]
                     for i in range(len(b) - 1)]

            for m, bm in enumerate(b):
                slab[pl.ds((m + 1) * din + r0, ch), :] = bm.astype(slab.dtype)
            return carry

        if n_chunks == 1:
            chunk_body(0, 0)
        else:
            # fori_loop (not a static Python for) bounds the vreg live ranges.
            lax.fori_loop(0, n_chunks, chunk_body, 0)

        # ---- fused (base + M spline) MXU matmul: (Dout, rows)@(rows, bn) ----
        basis = slab[0:rows, :]
        if basis.dtype != w_refs[l].dtype:          # f32 slab path (v5e)
            basis = basis.astype(w_refs[l].dtype)
        y = jnp.dot(w_refs[l][...], basis,
                    preferred_element_type=jnp.float32)     # (dout, bn) f32
        out_refs[l][...] = y.astype(out_refs[l].dtype)


def kan_forward(x_flat, packed_weights, widths, grid_pts,
                block_n=512, basis_dtype=None):
    """Run the full KAN forward (all layers) in one pallas_call.

    x_flat:          (N, widths[0]) f32
    packed_weights:  list of (widths[l+1], (M+1)*widths[l]) bf16 arrays
    returns:         list of per-layer activations, each (N, widths[l+1]) f32
    """
    N, din0 = x_flat.shape
    assert din0 == widths[0]
    L = len(widths) - 1

    if basis_dtype is None:
        basis_dtype = _default_basis_dtype()
    # Keep slab stores tile-aligned: only use the bf16 slab/basis path when
    # every layer input width is a multiple of 16.
    if basis_dtype == jnp.bfloat16 and any(w % 16 for w in widths[:-1]):
        basis_dtype = jnp.float32

    # Batch tile: largest multiple of 128 that divides N (<= block_n).
    # bn >= 256 fills the 256-wide MXU and amortises per-grid-step overhead
    # on v6e/v7x; multiple tiles shard across v7x's two TensorCores.
    bn = None
    cand = (min(block_n, N) // 128) * 128
    while cand >= 128:
        if N % cand == 0:
            bn = cand
            break
        cand -= 128
    if bn is None:
        bn = N                                   # single (padded) batch block

    x_t = jnp.transpose(x_flat)                  # (widths[0], N): batch on lanes
    max_rows = (M + 1) * max(widths[:-1])

    kern = functools.partial(_kan_fwd_kernel, widths=tuple(widths),
                             grid_pts=tuple(grid_pts), degree=K,
                             basis_dtype=basis_dtype)

    in_specs = [pl.BlockSpec((widths[0], bn), lambda i: (0, i))]
    for l in range(L):
        dout, rows = widths[l + 1], (M + 1) * widths[l]
        # Constant index_map -> the weight block is DMA'd once, not per step.
        in_specs.append(pl.BlockSpec((dout, rows), lambda i: (0, 0)))
    out_specs = [pl.BlockSpec((widths[l + 1], bn), lambda i: (0, i))
                 for l in range(L)]
    out_shape = tuple(jax.ShapeDtypeStruct((widths[l + 1], N), jnp.float32)
                      for l in range(L))

    outs = pl.pallas_call(
        kern,
        out_shape=out_shape,
        grid_spec=pltpu.PrefetchScalarGridSpec(
            num_scalar_prefetch=0,
            grid=(N // bn,),
            in_specs=in_specs,
            out_specs=out_specs,
            scratch_shapes=[pltpu.VMEM((max_rows, bn), basis_dtype)],
        ),
        compiler_params=pltpu.CompilerParams(
            dimension_semantics=("parallel",)),
    )(x_t, *packed_weights)

    # Per-layer activations are part of the module's forward semantics
    # (self.acts_scale feeds reg()); transpose back to (N, width[l+1]).
    return [jnp.transpose(o) for o in outs]


class KANModelPallas:
    """JAX/Pallas equivalent of KANModel.forward.

    Each KANLayer maps (N, width[l]) -> (N, width[l+1]) with a per-edge
    learnable function: SiLU base + cubic B-spline over `grid_range`.
    Parameters are initialized deterministically from a PRNG seed and packed
    per layer into a single (Dout, (M+1)*Din) matrix:
      cols [0, Din)              -> scale_base           (SiLU path)
      cols [(m+1)Din, (m+2)Din)  -> coef[m] / (K! h^K)   (spline path; the
                                    uniform-knot Cox-de Boor normalisation is
                                    pre-folded here)
    Weights are stored bf16 for the MXU (f32 accumulation in-kernel).
    """

    def __init__(self, width, grid_range, seed=0):
        self.width = list(width)
        self.depth = len(width) - 1
        self.grid_pts, h = _make_grid(grid_range)
        norm = 1.0
        for d in range(1, K + 1):
            norm *= d * h
        spline_norm = 1.0 / norm                     # = 1 / (K! * h^K)

        # TODO(synk): torch.manual_seed-exact KANLayer init cannot be
        # reproduced without torch; parameters are generated deterministically
        # with jax.random instead.
        key = jax.random.PRNGKey(seed)
        self.packed_weights = []
        for l in range(self.depth):
            din, dout = width[l], width[l + 1]
            key, k1, k2 = jax.random.split(key, 3)
            scale_base = (1.0 / np.sqrt(din)) * (
                1.0 + 0.1 * jax.random.normal(k1, (din, dout), jnp.float32))
            coef = 0.1 * jax.random.normal(k2, (M, din, dout), jnp.float32)
            packed = jnp.concatenate(
                [scale_base[None], coef * spline_norm], axis=0)  # (M+1,din,dout)
            packed = jnp.transpose(packed, (2, 0, 1)).reshape(
                dout, (M + 1) * din)
            self.packed_weights.append(packed.astype(jnp.bfloat16))
        self.acts_scale = []

    def __call__(self, x):
        # torch: x = x.view(-1, width[0]) -- row-major flatten == reshape
        x = jnp.asarray(x, jnp.float32).reshape(-1, self.width[0])
        acts = kan_forward(x, self.packed_weights, self.width, self.grid_pts)
        self.acts_scale = acts          # mirrors torch module attribute
        return acts[-1]

    # TODO(synk): reg() is a host-side scalar regularizer over acts_scale
    # (uses .item()); it is not part of forward and stays in plain JAX/NumPy.


if __name__ == "__main__":
    # Example input consistent with x.view(-1, width[0]):
    # (2, 4, 16, 16) -> 2048 elements -> (128, 16) rows of width[0]=16.
    width = [16, 32, 8]
    grid_range = [-1.0, 1.0]

    key = jax.random.PRNGKey(0)
    x = jax.random.normal(key, (2, 4, 16, 16), dtype=jnp.float32)

    model = KANModelPallas(width=width, grid_range=grid_range, seed=0)
    out = model(x)
    out = jax.block_until_ready(out)

    assert out.shape == (128, width[-1]), out.shape
    assert len(model.acts_scale) == len(width) - 1
    assert bool(jnp.all(jnp.isfinite(out)))
    print("KERNEL_OK")
</pallas_src>

<mosaic_0001>
module attributes {stable_mosaic.version = 11 : i64} {
  func.func @_kan_fwd_kernel(%arg0: i32, %arg1: memref<16x128xf32, #tpu.memory_space<vmem>>, %arg2: memref<32x144xbf16, #tpu.memory_space<vmem>>, %arg3: memref<8x288xbf16, #tpu.memory_space<vmem>>, %arg4: memref<32x128xf32, #tpu.memory_space<vmem>>, %arg5: memref<8x128xf32, #tpu.memory_space<vmem>>, %arg6: memref<288x128xf32, #tpu.memory_space<vmem>>) attributes {dimension_semantics = [#tpu.dimension_semantics<parallel>], iteration_bounds = array<i64: 1>, scalar_prefetch = 0 : i64, scratch_operands = 1 : i64, tpu.core_type = #tpu.core_type<tc>, window_params = [{transform_indices = @transform_0, window_bounds = array<i64: 16, 128>}, {pipeline_mode = #tpu.pipeline_mode<synchronous>, transform_indices = @transform_1, window_bounds = array<i64: 32, 144>}, {pipeline_mode = #tpu.pipeline_mode<synchronous>, transform_indices = @transform_2, window_bounds = array<i64: 8, 288>}, {transform_indices = @transform_3, window_bounds = array<i64: 32, 128>}, {transform_indices = @transform_4, window_bounds = array<i64: 8, 128>}]} {
    %c0_i32 = arith.constant 0 : i32
    %c2_i32 = arith.constant 2 : i32
    %0 = arith.addi %c0_i32, %c2_i32 : i32
    %c1_i32 = arith.constant 1 : i32
    scf.for %arg7 = %c0_i32 to %0 step %c1_i32  : i32 {
      %c8_i32 = arith.constant 8 : i32
      %12 = arith.muli %arg7, %c8_i32 : i32
      %13 = tpu.assume_multiple %12, 8 : i32
      %14 = arith.index_cast %13 : i32 to index
      %c0_16 = arith.constant 0 : index
      %15 = vector.load %arg1[%14, %c0_16] : memref<16x128xf32, #tpu.memory_space<vmem>>, vector<8x128xf32>
      %16 = arith.negf %15 : vector<8x128xf32>
      %17 = math.exp %16 : vector<8x128xf32>
      %cst_17 = arith.constant 1.000000e+00 : f32
      %18 = vector.broadcast %cst_17 : f32 to vector<8x128xf32>
      %19 = arith.addf %18, %17 : vector<8x128xf32>
      %20 = arith.divf %18, %19 : vector<8x128xf32>
      %21 = arith.mulf %15, %20 : vector<8x128xf32>
      %22 = arith.index_cast %13 : i32 to index
      %c0_18 = arith.constant 0 : index
      %23 = vector.load %arg6[%22, %c0_18] : memref<288x128xf32, #tpu.memory_space<vmem>>, vector<8x128xf32>
      tpu.vector_store %arg6[%22, %c0_18], %21 {strides = array<i32>} : memref<288x128xf32, #tpu.memory_space<vmem>>, vector<8x128xf32>,
      %cst_19 = arith.constant -2.200000e+00 : f32
      %24 = vector.broadcast %cst_19 : f32 to vector<8x128xf32>
      %25 = arith.cmpf oge, %15, %24 : vector<8x128xf32>
      %26 = arith.extui %25 : vector<8x128xi1> to vector<8x128xi32>
      %27 = arith.sitofp %26 : vector<8x128xi32> to vector<8x128xf32>
      %cst_20 = arith.constant -1.800000e+00 : f32
      %28 = vector.broadcast %cst_20 : f32 to vector<8x128xf32>
      %29 = arith.cmpf oge, %15, %28 : vector<8x128xf32>
      %30 = arith.extui %29 : vector<8x128xi1> to vector<8x128xi32>
      %31 = arith.sitofp %30 : vector<8x128xi32> to vector<8x128xf32>
      %cst_21 = arith.constant -1.400000e+00 : f32
      %32 = vector.broadcast %cst_21 : f32 to vector<8x128xf32>
      %33 = arith.cmpf oge, %15, %32 : vector<8x128xf32>
      %34 = arith.extui %33 : vector<8x128xi1> to vector<8x128xi32>
      %35 = arith.sitofp %34 : vector<8x128xi32> to vector<8x128xf32>
      %cst_22 = arith.constant -1.000000e+00 : f32
      %36 = vector.broadcast %cst_22 : f32 to vector<8x128xf32>
      %37 = arith.cmpf oge, %15, %36 : vector<8x128xf32>
      %38 = arith.extui %37 : vector<8x128xi1> to vector<8x128xi32>
      %39 = arith.sitofp %38 : vector<8x128xi32> to vector<8x128xf32>
      %cst_23 = arith.constant -6.000000e-01 : f32
      %40 = vector.broadcast %cst_23 : f32 to vector<8x128xf32>
      %41 = arith.cmpf oge, %15, %40 : vector<8x128xf32>
      %42 = arith.extui %41 : vector<8x128xi1> to vector<8x128xi32>
      %43 = arith.sitofp %42 : vector<8x128xi32> to vector<8x128xf32>
      %cst_24 = arith.constant -2.000000e-01 : f32
      %44 = vector.broadcast %cst_24 : f32 to vector<8x128xf32>
      %45 = arith.cmpf oge, %15, %44 : vector<8x128xf32>
      %46 = arith.extui %45 : vector<8x128xi1> to vector<8x128xi32>
      %47 = arith.sitofp %46 : vector<8x128xi32> to vector<8x128xf32>
      %cst_25 = arith.constant 2.000000e-01 : f32
      %48 = vector.broadcast %cst_25 : f32 to vector<8x128xf32>
      %49 = arith.cmpf oge, %15, %48 : vector<8x128xf32>
      %50 = arith.extui %49 : vector<8x128xi1> to vector<8x128xi32>
      %51 = arith.sitofp %50 : vector<8x128xi32> to vector<8x128xf32>
      %cst_26 = arith.constant 6.000000e-01 : f32
      %52 = vector.broadcast %cst_26 : f32 to vector<8x128xf32>
      %53 = arith.cmpf oge, %15, %52 : vector<8x128xf32>
      %54 = arith.extui %53 : vector<8x128xi1> to vector<8x128xi32>
      %55 = arith.sitofp %54 : vector<8x128xi32> to vector<8x128xf32>
      %cst_27 = arith.constant 1.000000e+00 : f32
      %56 = vector.broadcast %cst_27 : f32 to vector<8x128xf32>
      %57 = arith.cmpf oge, %15, %56 : vector<8x128xf32>
      %58 = arith.extui %57 : vector<8x128xi1> to vector<8x128xi32>
      %59 = arith.sitofp %58 : vector<8x128xi32> to vector<8x128xf32>
      %cst_28 = arith.constant 1.400000e+00 : f32
      %60 = vector.broadcast %cst_28 : f32 to vector<8x128xf32>
      %61 = arith.cmpf oge, %15, %60 : vector<8x128xf32>
      %62 = arith.extui %61 : vector<8x128xi1> to vector<8x128xi32>
      %63 = arith.sitofp %62 : vector<8x128xi32> to vector<8x128xf32>
      %cst_29 = arith.constant 1.800000e+00 : f32
      %64 = vector.broadcast %cst_29 : f32 to vector<8x128xf32>
      %65 = arith.cmpf oge, %15, %64 : vector<8x128xf32>
      %66 = arith.extui %65 : vector<8x128xi1> to vector<8x128xi32>
      %67 = arith.sitofp %66 : vector<8x128xi32> to vector<8x128xf32>
      %cst_30 = arith.constant 2.200000e+00 : f32
      %68 = vector.broadcast %cst_30 : f32 to vector<8x128xf32>
      %69 = arith.cmpf oge, %15, %68 : vector<8x128xf32>
      %70 = arith.extui %69 : vector<8x128xi1> to vector<8x128xi32>
      %71 = arith.sitofp %70 : vector<8x128xi32> to vector<8x128xf32>
      %72 = arith.subf %27, %31 : vector<8x128xf32>
      %73 = arith.subf %31, %35 : vector<8x128xf32>
      %74 = arith.subf %35, %39 : vector<8x128xf32>
      %75 = arith.subf %39, %43 : vector<8x128xf32>
      %76 = arith.subf %43, %47 : vector<8x128xf32>
      %77 = arith.subf %47, %51 : vector<8x128xf32>
      %78 = arith.subf %51, %55 : vector<8x128xf32>
      %79 = arith.subf %55, %59 : vector<8x128xf32>
      %80 = arith.subf %59, %63 : vector<8x128xf32>
      %81 = arith.subf %63, %67 : vector<8x128xf32>
      %82 = arith.subf %67, %71 : vector<8x128xf32>
      %cst_31 = arith.constant -2.200000e+00 : f32
      %83 = vector.broadcast %cst_31 : f32 to vector<8x128xf32>
      %84 = arith.subf %15, %83 : vector<8x128xf32>
      %cst_32 = arith.constant -1.800000e+00 : f32
      %85 = vector.broadcast %cst_32 : f32 to vector<8x128xf32>
      %86 = arith.subf %15, %85 : vector<8x128xf32>
      %cst_33 = arith.constant -1.400000e+00 : f32
      %87 = vector.broadcast %cst_33 : f32 to vector<8x128xf32>
      %88 = arith.subf %15, %87 : vector<8x128xf32>
      %cst_34 = arith.constant -1.000000e+00 : f32
      %89 = vector.broadcast %cst_34 : f32 to vector<8x128xf32>
      %90 = arith.subf %15, %89 : vector<8x128xf32>
      %cst_35 = arith.constant -6.000000e-01 : f32
      %91 = vector.broadcast %cst_35 : f32 to vector<8x128xf32>
      %92 = arith.subf %15, %91 : vector<8x128xf32>
      %cst_36 = arith.constant -2.000000e-01 : f32
      %93 = vector.broadcast %cst_36 : f32 to vector<8x128xf32>
      %94 = arith.subf %15, %93 : vector<8x128xf32>
      %cst_37 = arith.constant 2.000000e-01 : f32
      %95 = vector.broadcast %cst_37 : f32 to vector<8x128xf32>
      %96 = arith.subf %15, %95 : vector<8x128xf32>
      %cst_38 = arith.constant 6.000000e-01 : f32
      %97 = vector.broadcast %cst_38 : f32 to vector<8x128xf32>
      %98 = arith.subf %15, %97 : vector<8x128xf32>
      %cst_39 = arith.constant 1.000000e+00 : f32
      %99 = vector.broadcast %cst_39 : f32 to vector<8x128xf32>
      %100 = arith.subf %15, %99 : vector<8x128xf32>
      %cst_40 = arith.constant 1.400000e+00 : f32
      %101 = vector.broadcast %cst_40 : f32 to vector<8x128xf32>
      %102 = arith.subf %15, %101 : vector<8x128xf32>
      %cst_41 = arith.constant 1.800000e+00 : f32
      %103 = vector.broadcast %cst_41 : f32 to vector<8x128xf32>
      %104 = arith.subf %15, %103 : vector<8x128xf32>
      %cst_42 = arith.constant 2.200000e+00 : f32
      %105 = vector.broadcast %cst_42 : f32 to vector<8x128xf32>
      %106 = arith.subf %15, %105 : vector<8x128xf32>
      %107 = arith.mulf %84, %72 : vector<8x128xf32>
      %108 = arith.mulf %88, %73 : vector<8x128xf32>
      %109 = arith.subf %107, %108 : vector<8x128xf32>
      %110 = arith.mulf %86, %73 : vector<8x128xf32>
      %111 = arith.mulf %90, %74 : vector<8x128xf32>
      %112 = arith.subf %110, %111 : vector<8x128xf32>
      %113 = arith.mulf %88, %74 : vector<8x128xf32>
      %114 = arith.mulf %92, %75 : vector<8x128xf32>
      %115 = arith.subf %113, %114 : vector<8x128xf32>
      %116 = arith.mulf %90, %75 : vector<8x128xf32>
      %117 = arith.mulf %94, %76 : vector<8x128xf32>
      %118 = arith.subf %116, %117 : vector<8x128xf32>
      %119 = arith.mulf %92, %76 : vector<8x128xf32>
      %120 = arith.mulf %96, %77 : vector<8x128xf32>
      %121 = arith.subf %119, %120 : vector<8x128xf32>
      %122 = arith.mulf %94, %77 : vector<8x128xf32>
      %123 = arith.mulf %98, %78 : vector<8x128xf32>
      %124 = arith.subf %122, %123 : vector<8x128xf32>
      %125 = arith.mulf %96, %78 : vector<8x128xf32>
      %126 = arith.mulf %100, %79 : vector<8x128xf32>
      %127 = arith.subf %125, %126 : vector<8x128xf32>
      %128 = arith.mulf %98, %79 : vector<8x128xf32>
      %129 = arith.mulf %102, %80 : vector<8x128xf32>
      %130 = arith.subf %128, %129 : vector<8x128xf32>
      %131 = arith.mulf %100, %80 : vector<8x128xf32>
      %132 = arith.mulf %104, %81 : vector<8x128xf32>
      %133 = arith.subf %131, %132 : vector<8x128xf32>
      %134 = arith.mulf %102, %81 : vector<8x128xf32>
      %135 = arith.mulf %106, %82 : vector<8x128xf32>
      %136 = arith.subf %134, %135 : vector<8x128xf32>
      %137 = arith.mulf %84, %109 : vector<8x128xf32>
      %138 = arith.mulf %90, %112 : vector<8x128xf32>
      %139 = arith.subf %137, %138 : vector<8x128xf32>
      %140 = arith.mulf %86, %112 : vector<8x128xf32>
      %141 = arith.mulf %92, %115 : vector<8x128xf32>
      %142 = arith.subf %140, %141 : vector<8x128xf32>
      %143 = arith.mulf %88, %115 : vector<8x128xf32>
      %144 = arith.mulf %94, %118 : vector<8x128xf32>
      %145 = arith.subf %143, %144 : vector<8x128xf32>
      %146 = arith.mulf %90, %118 : vector<8x128xf32>
      %147 = arith.mulf %96, %121 : vector<8x128xf32>
      %148 = arith.subf %146, %147 : vector<8x128xf32>
      %149 = arith.mulf %92, %121 : vector<8x128xf32>
      %150 = arith.mulf %98, %124 : vector<8x128xf32>
      %151 = arith.subf %149, %150 : vector<8x128xf32>
      %152 = arith.mulf %94, %124 : vector<8x128xf32>
      %153 = arith.mulf %100, %127 : vector<8x128xf32>
      %154 = arith.subf %152, %153 : vector<8x128xf32>
      %155 = arith.mulf %96, %127 : vector<8x128xf32>
      %156 = arith.mulf %102, %130 : vector<8x128xf32>
      %157 = arith.subf %155, %156 : vector<8x128xf32>
      %158 = arith.mulf %98, %130 : vector<8x128xf32>
      %159 = arith.mulf %104, %133 : vector<8x128xf32>
      %160 = arith.subf %158, %159 : vector<8x128xf32>
      %161 = arith.mulf %100, %133 : vector<8x128xf32>
      %162 = arith.mulf %106, %136 : vector<8x128xf32>
      %163 = arith.subf %161, %162 : vector<8x128xf32>
      %164 = arith.mulf %84, %139 : vector<8x128xf32>
      %165 = arith.mulf %92, %142 : vector<8x128xf32>
      %166 = arith.subf %164, %165 : vector<8x128xf32>
      %167 = arith.mulf %86, %142 : vector<8x128xf32>
      %168 = arith.mulf %94, %145 : vector<8x128xf32>
      %169 = arith.subf %167, %168 : vector<8x128xf32>
      %170 = arith.mulf %88, %145 : vector<8x128xf32>
      %171 = arith.mulf %96, %148 : vector<8x128xf32>
      %172 = arith.subf %170, %171 : vector<8x128xf32>
      %173 = arith.mulf %90, %148 : vector<8x128xf32>
      %174 = arith.mulf %98, %151 : vector<8x128xf32>
      %175 = arith.subf %173, %174 : vector<8x128xf32>
      %176 = arith.mulf %92, %151 : vector<8x128xf32>
      %177 = arith.mulf %100, %154 : vector<8x128xf32>
      %178 = arith.subf %176, %177 : vector<8x128xf32>
      %179 = arith.mulf %94, %154 : vector<8x128xf32>
      %180 = arith.mulf %102, %157 : vector<8x128xf32>
      %181 = arith.subf %179, %180 : vector<8x128xf32>
      %182 = arith.mulf %96, %157 : vector<8x128xf32>
      %183 = arith.mulf %104, %160 : vector<8x128xf32>
      %184 = arith.subf %182, %183 : vector<8x128xf32>
      %185 = arith.mulf %98, %160 : vector<8x128xf32>
      %186 = arith.mulf %106, %163 : vector<8x128xf32>
      %187 = arith.subf %185, %186 : vector<8x128xf32>
      %c16_i32 = arith.constant 16 : i32
      %188 = arith.addi %c16_i32, %13 : i32
      %189 = arith.index_cast %188 : i32 to index
      %c0_43 = arith.constant 0 : index
      %190 = vector.load %arg6[%189, %c0_43] : memref<288x128xf32, #tpu.memory_space<vmem>>, vector<8x128xf32>
      tpu.vector_store %arg6[%189, %c0_43], %166 {strides = array<i32>} : memref<288x128xf32, #tpu.memory_space<vmem>>, vector<8x128xf32>,
      %c32_i32 = arith.constant 32 : i32
      %191 = arith.addi %c32_i32, %13 : i32
      %192 = arith.index_cast %191 : i32 to index
      %c0_44 = arith.constant 0 : index
      %193 = vector.load %arg6[%192, %c0_44] : memref<288x128xf32, #tpu.memory_space<vmem>>, vector<8x128xf32>
      tpu.vector_store %arg6[%192, %c0_44], %169 {strides = array<i32>} : memref<288x128xf32, #tpu.memory_space<vmem>>, vector<8x128xf32>,
      %c48_i32 = arith.constant 48 : i32
      %194 = arith.addi %c48_i32, %13 : i32
      %195 = arith.index_cast %194 : i32 to index
      %c0_45 = arith.constant 0 : index
      %196 = vector.load %arg6[%195, %c0_45] : memref<288x128xf32, #tpu.memory_space<vmem>>, vector<8x128xf32>
      tpu.vector_store %arg6[%195, %c0_45], %172 {strides = array<i32>} : memref<288x128xf32, #tpu.memory_space<vmem>>, vector<8x128xf32>,
      %c64_i32 = arith.constant 64 : i32
      %197 = arith.addi %c64_i32, %13 : i32
      %198 = arith.index_cast %197 : i32 to index
      %c0_46 = arith.constant 0 : index
      %199 = vector.load %arg6[%198, %c0_46] : memref<288x128xf32, #tpu.memory_space<vmem>>, vector<8x128xf32>
      tpu.vector_store %arg6[%198, %c0_46], %175 {strides = array<i32>} : memref<288x128xf32, #tpu.memory_space<vmem>>, vector<8x128xf32>,
      %c80_i32 = arith.constant 80 : i32
      %200 = arith.addi %c80_i32, %13 : i32
      %201 = arith.index_cast %200 : i32 to index
      %c0_47 = arith.constant 0 : index
      %202 = vector.load %arg6[%201, %c0_47] : memref<288x128xf32, #tpu.memory_space<vmem>>, vector<8x128xf32>
      tpu.vector_store %arg6[%201, %c0_47], %178 {strides = array<i32>} : memref<288x128xf32, #tpu.memory_space<vmem>>, vector<8x128xf32>,
      %c96_i32 = arith.constant 96 : i32
      %203 = arith.addi %c96_i32, %13 : i32
      %204 = arith.index_cast %203 : i32 to index
      %c0_48 = arith.constant 0 : index
      %205 = vector.load %arg6[%204, %c0_48] : memref<288x128xf32, #tpu.memory_space<vmem>>, vector<8x128xf32>
      tpu.vector_store %arg6[%204, %c0_48], %181 {strides = array<i32>} : memref<288x128xf32, #tpu.memory_space<vmem>>, vector<8x128xf32>,
      %c112_i32 = arith.constant 112 : i32
      %206 = arith.addi %c112_i32, %13 : i32
      %207 = arith.index_cast %206 : i32 to index
      %c0_49 = arith.constant 0 : index
      %208 = vector.load %arg6[%207, %c0_49] : memref<288x128xf32, #tpu.memory_space<vmem>>, vector<8x128xf32>
      tpu.vector_store %arg6[%207, %c0_49], %184 {strides = array<i32>} : memref<288x128xf32, #tpu.memory_space<vmem>>, vector<8x128xf32>,
      %c128_i32 = arith.constant 128 : i32
      %209 = arith.addi %c128_i32, %13 : i32
      %210 = arith.index_cast %209 : i32 to index
      %c0_50 = arith.constant 0 : index
      %211 = vector.load %arg6[%210, %c0_50] : memref<288x128xf32, #tpu.memory_space<vmem>>, vector<8x128xf32>
      tpu.vector_store %arg6[%210, %c0_50], %187 {strides = array<i32>} : memref<288x128xf32, #tpu.memory_space<vmem>>, vector<8x128xf32>,
    }
    %c2_i32_0 = arith.constant 2 : i32
    %c0 = arith.constant 0 : index
    %c0_1 = arith.constant 0 : index
    %1 = vector.load %arg6[%c0, %c0_1] : memref<288x128xf32, #tpu.memory_space<vmem>>, vector<144x128xf32>
    %2 = arith.truncf %1 : vector<144x128xf32> to vector<144x128xbf16>
    %c0_2 = arith.constant 0 : index
    %c0_3 = arith.constant 0 : index
    %3 = vector.load %arg2[%c0_2, %c0_3] : memref<32x144xbf16, #tpu.memory_space<vmem>>, vector<32x144xbf16>
    %cst = arith.constant dense<0.000000e+00> : vector<32x128xf32>
    %4 = tpu.matmul %3, %2, %cst {dimension_numbers = #tpu.dot_dimension_numbers<[1], [0], [0], [1], [0, 0, 1, 1], [], []>} : vector<32x144xbf16>, vector<144x128xbf16>, vector<32x128xf32> -> vector<32x128xf32>
    %c0_4 = arith.constant 0 : index
    %c0_5 = arith.constant 0 : index
    %5 = vector.load %arg4[%c0_4, %c0_5] : memref<32x128xf32, #tpu.memory_space<vmem>>, vector<32x128xf32>
    tpu.vector_store %arg4[%c0_4, %c0_5], %4 {strides = array<i32>} : memref<32x128xf32, #tpu.memory_space<vmem>>, vector<32x128xf32>,
    %c0_i32_6 = arith.constant 0 : i32
    %c4_i32 = arith.constant 4 : i32
    %6 = arith.addi %c0_i32_6, %c4_i32 : i32
    %c1_i32_7 = arith.constant 1 : i32
    scf.for %arg7 = %c0_i32_6 to %6 step %c1_i32_7  : i32 {
      %c8_i32 = arith.constant 8 : i32
      %12 = arith.muli %arg7, %c8_i32 : i32
      %13 = tpu.assume_multiple %12, 8 : i32
      %14 = arith.index_cast %13 : i32 to index
      %c0_16 = arith.constant 0 : index
      %15 = vector.load %arg4[%14, %c0_16] : memref<32x128xf32, #tpu.memory_space<vmem>>, vector<8x128xf32>
      %16 = arith.negf %15 : vector<8x128xf32>
      %17 = math.exp %16 : vector<8x128xf32>
      %cst_17 = arith.constant 1.000000e+00 : f32
      %18 = vector.broadcast %cst_17 : f32 to vector<8x128xf32>
      %19 = arith.addf %18, %17 : vector<8x128xf32>
      %20 = arith.divf %18, %19 : vector<8x128xf32>
      %21 = arith.mulf %15, %20 : vector<8x128xf32>
      %22 = arith.index_cast %13 : i32 to index
      %c0_18 = arith.constant 0 : index
      %23 = vector.load %arg6[%22, %c0_18] : memref<288x128xf32, #tpu.memory_space<vmem>>, vector<8x128xf32>
      tpu.vector_store %arg6[%22, %c0_18], %21 {strides = array<i32>} : memref<288x128xf32, #tpu.memory_space<vmem>>, vector<8x128xf32>,
      %cst_19 = arith.constant -2.200000e+00 : f32
      %24 = vector.broadcast %cst_19 : f32 to vector<8x128xf32>
      %25 = arith.cmpf oge, %15, %24 : vector<8x128xf32>
      %26 = arith.extui %25 : vector<8x128xi1> to vector<8x128xi32>
      %27 = arith.sitofp %26 : vector<8x128xi32> to vector<8x128xf32>
      %cst_20 = arith.constant -1.800000e+00 : f32
      %28 = vector.broadcast %cst_20 : f32 to vector<8x128xf32>
      %29 = arith.cmpf oge, %15, %28 : vector<8x128xf32>
      %30 = arith.extui %29 : vector<8x128xi1> to vector<8x128xi32>
      %31 = arith.sitofp %30 : vector<8x128xi32> to vector<8x128xf32>
      %cst_21 = arith.constant -1.400000e+00 : f32
      %32 = vector.broadcast %cst_21 : f32 to vector<8x128xf32>
      %33 = arith.cmpf oge, %15, %32 : vector<8x128xf32>
      %34 = arith.extui %33 : vector<8x128xi1> to vector<8x128xi32>
      %35 = arith.sitofp %34 : vector<8x128xi32> to vector<8x128xf32>
      %cst_22 = arith.constant -1.000000e+00 : f32
      %36 = vector.broadcast %cst_22 : f32 to vector<8x128xf32>
      %37 = arith.cmpf oge, %15, %36 : vector<8x128xf32>
      %38 = arith.extui %37 : vector<8x128xi1> to vector<8x128xi32>
      %39 = arith.sitofp %38 : vector<8x128xi32> to vector<8x128xf32>
      %cst_23 = arith.constant -6.000000e-01 : f32
      %40 = vector.broadcast %cst_23 : f32 to vector<8x128xf32>
      %41 = arith.cmpf oge, %15, %40 : vector<8x128xf32>
      %42 = arith.extui %41 : vector<8x128xi1> to vector<8x128xi32>
      %43 = arith.sitofp %42 : vector<8x128xi32> to vector<8x128xf32>
      %cst_24 = arith.constant -2.000000e-01 : f32
      %44 = vector.broadcast %cst_24 : f32 to vector<8x128xf32>
      %45 = arith.cmpf oge, %15, %44 : vector<8x128xf32>
      %46 = arith.extui %45 : vector<8x128xi1> to vector<8x128xi32>
      %47 = arith.sitofp %46 : vector<8x128xi32> to vector<8x128xf32>
      %cst_25 = arith.constant 2.000000e-01 : f32
      %48 = vector.broadcast %cst_25 : f32 to vector<8x128xf32>
      %49 = arith.cmpf oge, %15, %48 : vector<8x128xf32>
      %50 = arith.extui %49 : vector<8x128xi1> to vector<8x128xi32>
      %51 = arith.sitofp %50 : vector<8x128xi32> to vector<8x128xf32>
      %cst_26 = arith.constant 6.000000e-01 : f32
      %52 = vector.broadcast %cst_26 : f32 to vector<8x128xf32>
      %53 = arith.cmpf oge, %15, %52 : vector<8x128xf32>
      %54 = arith.extui %53 : vector<8x128xi1> to vector<8x128xi32>
      %55 = arith.sitofp %54 : vector<8x128xi32> to vector<8x128xf32>
      %cst_27 = arith.constant 1.000000e+00 : f32
      %56 = vector.broadcast %cst_27 : f32 to vector<8x128xf32>
      %57 = arith.cmpf oge, %15, %56 : vector<8x128xf32>
      %58 = arith.extui %57 : vector<8x128xi1> to vector<8x128xi32>
      %59 = arith.sitofp %58 : vector<8x128xi32> to vector<8x128xf32>
      %cst_28 = arith.constant 1.400000e+00 : f32
      %60 = vector.broadcast %cst_28 : f32 to vector<8x128xf32>
      %61 = arith.cmpf oge, %15, %60 : vector<8x128xf32>
      %62 = arith.extui %61 : vector<8x128xi1> to vector<8x128xi32>
      %63 = arith.sitofp %62 : vector<8x128xi32> to vector<8x128xf32>
      %cst_29 = arith.constant 1.800000e+00 : f32
      %64 = vector.broadcast %cst_29 : f32 to vector<8x128xf32>
      %65 = arith.cmpf oge, %15, %64 : vector<8x128xf32>
      %66 = arith.extui %65 : vector<8x128xi1> to vector<8x128xi32>
      %67 = arith.sitofp %66 : vector<8x128xi32> to vector<8x128xf32>
      %cst_30 = arith.constant 2.200000e+00 : f32
      %68 = vector.broadcast %cst_30 : f32 to vector<8x128xf32>
      %69 = arith.cmpf oge, %15, %68 : vector<8x128xf32>
      %70 = arith.extui %69 : vector<8x128xi1> to vector<8x128xi32>
      %71 = arith.sitofp %70 : vector<8x128xi32> to vector<8x128xf32>
      %72 = arith.subf %27, %31 : vector<8x128xf32>
      %73 = arith.subf %31, %35 : vector<8x128xf32>
      %74 = arith.subf %35, %39 : vector<8x128xf32>
      %75 = arith.subf %39, %43 : vector<8x128xf32>
      %76 = arith.subf %43, %47 : vector<8x128xf32>
      %77 = arith.subf %47, %51 : vector<8x128xf32>
      %78 = arith.subf %51, %55 : vector<8x128xf32>
      %79 = arith.subf %55, %59 : vector<8x128xf32>
      %80 = arith.subf %59, %63 : vector<8x128xf32>
      %81 = arith.subf %63, %67 : vector<8x128xf32>
      %82 = arith.subf %67, %71 : vector<8x128xf32>
      %cst_31 = arith.constant -2.200000e+00 : f32
      %83 = vector.broadcast %cst_31 : f32 to vector<8x128xf32>
      %84 = arith.subf %15, %83 : vector<8x128xf32>
      %cst_32 = arith.constant -1.800000e+00 : f32
      %85 = vector.broadcast %cst_32 : f32 to vector<8x128xf32>
      %86 = arith.subf %15, %85 : vector<8x128xf32>
      %cst_33 = arith.constant -1.400000e+00 : f32
      %87 = vector.broadcast %cst_33 : f32 to vector<8x128xf32>
      %88 = arith.subf %15, %87 : vector<8x128xf32>
      %cst_34 = arith.constant -1.000000e+00 : f32
      %89 = vector.broadcast %cst_34 : f32 to vector<8x128xf32>
      %90 = arith.subf %15, %89 : vector<8x128xf32>
      %cst_35 = arith.constant -6.000000e-01 : f32
      %91 = vector.broadcast %cst_35 : f32 to vector<8x128xf32>
      %92 = arith.subf %15, %91 : vector<8x128xf32>
      %cst_36 = arith.constant -2.000000e-01 : f32
      %93 = vector.broadcast %cst_36 : f32 to vector<8x128xf32>
      %94 = arith.subf %15, %93 : vector<8x128xf32>
      %cst_37 = arith.constant 2.000000e-01 : f32
      %95 = vector.broadcast %cst_37 : f32 to vector<8x128xf32>
      %96 = arith.subf %15, %95 : vector<8x128xf32>
      %cst_38 = arith.constant 6.000000e-01 : f32
      %97 = vector.broadcast %cst_38 : f32 to vector<8x128xf32>
      %98 = arith.subf %15, %97 : vector<8x128xf32>
      %cst_39 = arith.constant 1.000000e+00 : f32
      %99 = vector.broadcast %cst_39 : f32 to vector<8x128xf32>
      %100 = arith.subf %15, %99 : vector<8x128xf32>
      %cst_40 = arith.constant 1.400000e+00 : f32
      %101 = vector.broadcast %cst_40 : f32 to vector<8x128xf32>
      %102 = arith.subf %15, %101 : vector<8x128xf32>
      %cst_41 = arith.constant 1.800000e+00 : f32
      %103 = vector.broadcast %cst_41 : f32 to vector<8x128xf32>
      %104 = arith.subf %15, %103 : vector<8x128xf32>
      %cst_42 = arith.constant 2.200000e+00 : f32
      %105 = vector.broadcast %cst_42 : f32 to vector<8x128xf32>
      %106 = arith.subf %15, %105 : vector<8x128xf32>
      %107 = arith.mulf %84, %72 : vector<8x128xf32>
      %108 = arith.mulf %88, %73 : vector<8x128xf32>
      %109 = arith.subf %107, %108 : vector<8x128xf32>
      %110 = arith.mulf %86, %73 : vector<8x128xf32>
      %111 = arith.mulf %90, %74 : vector<8x128xf32>
      %112 = arith.subf %110, %111 : vector<8x128xf32>
      %113 = arith.mulf %88, %74 : vector<8x128xf32>
      %114 = arith.mulf %92, %75 : vector<8x128xf32>
      %115 = arith.subf %113, %114 : vector<8x128xf32>
      %116 = arith.mulf %90, %75 : vector<8x128xf32>
      %117 = arith.mulf %94, %76 : vector<8x128xf32>
      %118 = arith.subf %116, %117 : vector<8x128xf32>
      %119 = arith.mulf %92, %76 : vector<8x128xf32>
      %120 = arith.mulf %96, %77 : vector<8x128xf32>
      %121 = arith.subf %119, %120 : vector<8x128xf32>
      %122 = arith.mulf %94, %77 : vector<8x128xf32>
      %123 = arith.mulf %98, %78 : vector<8x128xf32>
      %124 = arith.subf %122, %123 : vector<8x128xf32>
      %125 = arith.mulf %96, %78 : vector<8x128xf32>
      %126 = arith.mulf %100, %79 : vector<8x128xf32>
      %127 = arith.subf %125, %126 : vector<8x128xf32>
      %128 = arith.mulf %98, %79 : vector<8x128xf32>
      %129 = arith.mulf %102, %80 : vector<8x128xf32>
      %130 = arith.subf %128, %129 : vector<8x128xf32>
      %131 = arith.mulf %100, %80 : vector<8x128xf32>
      %132 = arith.mulf %104, %81 : vector<8x128xf32>
      %133 = arith.subf %131, %132 : vector<8x128xf32>
      %134 = arith.mulf %102, %81 : vector<8x128xf32>
      %135 = arith.mulf %106, %82 : vector<8x128xf32>
      %136 = arith.subf %134, %135 : vector<8x128xf32>
      %137 = arith.mulf %84, %109 : vector<8x128xf32>
      %138 = arith.mulf %90, %112 : vector<8x128xf32>
      %139 = arith.subf %137, %138 : vector<8x128xf32>
      %140 = arith.mulf %86, %112 : vector<8x128xf32>
      %141 = arith.mulf %92, %115 : vector<8x128xf32>
      %142 = arith.subf %140, %141 : vector<8x128xf32>
      %143 = arith.mulf %88, %115 : vector<8x128xf32>
      %144 = arith.mulf %94, %118 : vector<8x128xf32>
      %145 = arith.subf %143, %144 : vector<8x128xf32>
      %146 = arith.mulf %90, %118 : vector<8x128xf32>
      %147 = arith.mulf %96, %121 : vector<8x128xf32>
      %148 = arith.subf %146, %147 : vector<8x128xf32>
      %149 = arith.mulf %92, %121 : vector<8x128xf32>
      %150 = arith.mulf %98, %124 : vector<8x128xf32>
      %151 = arith.subf %149, %150 : vector<8x128xf32>
      %152 = arith.mulf %94, %124 : vector<8x128xf32>
      %153 = arith.mulf %100, %127 : vector<8x128xf32>
      %154 = arith.subf %152, %153 : vector<8x128xf32>
      %155 = arith.mulf %96, %127 : vector<8x128xf32>
      %156 = arith.mulf %102, %130 : vector<8x128xf32>
      %157 = arith.subf %155, %156 : vector<8x128xf32>
      %158 = arith.mulf %98, %130 : vector<8x128xf32>
      %159 = arith.mulf %104, %133 : vector<8x128xf32>
      %160 = arith.subf %158, %159 : vector<8x128xf32>
      %161 = arith.mulf %100, %133 : vector<8x128xf32>
      %162 = arith.mulf %106, %136 : vector<8x128xf32>
      %163 = arith.subf %161, %162 : vector<8x128xf32>
      %164 = arith.mulf %84, %139 : vector<8x128xf32>
      %165 = arith.mulf %92, %142 : vector<8x128xf32>
      %166 = arith.subf %164, %165 : vector<8x128xf32>
      %167 = arith.mulf %86, %142 : vector<8x128xf32>
      %168 = arith.mulf %94, %145 : vector<8x128xf32>
      %169 = arith.subf %167, %168 : vector<8x128xf32>
      %170 = arith.mulf %88, %145 : vector<8x128xf32>
      %171 = arith.mulf %96, %148 : vector<8x128xf32>
      %172 = arith.subf %170, %171 : vector<8x128xf32>
      %173 = arith.mulf %90, %148 : vector<8x128xf32>
      %174 = arith.mulf %98, %151 : vector<8x128xf32>
      %175 = arith.subf %173, %174 : vector<8x128xf32>
      %176 = arith.mulf %92, %151 : vector<8x128xf32>
      %177 = arith.mulf %100, %154 : vector<8x128xf32>
      %178 = arith.subf %176, %177 : vector<8x128xf32>
      %179 = arith.mulf %94, %154 : vector<8x128xf32>
      %180 = arith.mulf %102, %157 : vector<8x128xf32>
      %181 = arith.subf %179, %180 : vector<8x128xf32>
      %182 = arith.mulf %96, %157 : vector<8x128xf32>
      %183 = arith.mulf %104, %160 : vector<8x128xf32>
      %184 = arith.subf %182, %183 : vector<8x128xf32>
      %185 = arith.mulf %98, %160 : vector<8x128xf32>
      %186 = arith.mulf %106, %163 : vector<8x128xf32>
      %187 = arith.subf %185, %186 : vector<8x128xf32>
      %c32_i32 = arith.constant 32 : i32
      %188 = arith.addi %c32_i32, %13 : i32
      %189 = arith.index_cast %188 : i32 to index
      %c0_43 = arith.constant 0 : index
      %190 = vector.load %arg6[%189, %c0_43] : memref<288x128xf32, #tpu.memory_space<vmem>>, vector<8x128xf32>
      tpu.vector_store %arg6[%189, %c0_43], %166 {strides = array<i32>} : memref<288x128xf32, #tpu.memory_space<vmem>>, vector<8x128xf32>,
      %c64_i32 = arith.constant 64 : i32
      %191 = arith.addi %c64_i32, %13 : i32
      %192 = arith.index_cast %191 : i32 to index
      %c0_44 = arith.constant 0 : index
      %193 = vector.load %arg6[%192, %c0_44] : memref<288x128xf32, #tpu.memory_space<vmem>>, vector<8x128xf32>
      tpu.vector_store %arg6[%192, %c0_44], %169 {strides = array<i32>} : memref<288x128xf32, #tpu.memory_space<vmem>>, vector<8x128xf32>,
      %c96_i32 = arith.constant 96 : i32
      %194 = arith.addi %c96_i32, %13 : i32
      %195 = arith.index_cast %194 : i32 to index
      %c0_45 = arith.constant 0 : index
      %196 = vector.load %arg6[%195, %c0_45] : memref<288x128xf32, #tpu.memory_space<vmem>>, vector<8x128xf32>
      tpu.vector_store %arg6[%195, %c0_45], %172 {strides = array<i32>} : memref<288x128xf32, #tpu.memory_space<vmem>>, vector<8x128xf32>,
      %c128_i32 = arith.constant 128 : i32
      %197 = arith.addi %c128_i32, %13 : i32
      %198 = arith.index_cast %197 : i32 to index
      %c0_46 = arith.constant 0 : index
      %199 = vector.load %arg6[%198, %c0_46] : memref<288x128xf32, #tpu.memory_space<vmem>>, vector<8x128xf32>
      tpu.vector_store %arg6[%198, %c0_46], %175 {strides = array<i32>} : memref<288x128xf32, #tpu.memory_space<vmem>>, vector<8x128xf32>,
      %c160_i32 = arith.constant 160 : i32
      %200 = arith.addi %c160_i32, %13 : i32
      %201 = arith.index_cast %200 : i32 to index
      %c0_47 = arith.constant 0 : index
      %202 = vector.load %arg6[%201, %c0_47] : memref<288x128xf32, #tpu.memory_space<vmem>>, vector<8x128xf32>
      tpu.vector_store %arg6[%201, %c0_47], %178 {strides = array<i32>} : memref<288x128xf32, #tpu.memory_space<vmem>>, vector<8x128xf32>,
      %c192_i32 = arith.constant 192 : i32
      %203 = arith.addi %c192_i32, %13 : i32
      %204 = arith.index_cast %203 : i32 to index
      %c0_48 = arith.constant 0 : index
      %205 = vector.load %arg6[%204, %c0_48] : memref<288x128xf32, #tpu.memory_space<vmem>>, vector<8x128xf32>
      tpu.vector_store %arg6[%204, %c0_48], %181 {strides = array<i32>} : memref<288x128xf32, #tpu.memory_space<vmem>>, vector<8x128xf32>,
      %c224_i32 = arith.constant 224 : i32
      %206 = arith.addi %c224_i32, %13 : i32
      %207 = arith.index_cast %206 : i32 to index
      %c0_49 = arith.constant 0 : index
      %208 = vector.load %arg6[%207, %c0_49] : memref<288x128xf32, #tpu.memory_space<vmem>>, vector<8x128xf32>
      tpu.vector_store %arg6[%207, %c0_49], %184 {strides = array<i32>} : memref<288x128xf32, #tpu.memory_space<vmem>>, vector<8x128xf32>,
      %c256_i32 = arith.constant 256 : i32
      %209 = arith.addi %c256_i32, %13 : i32
      %210 = arith.index_cast %209 : i32 to index
      %c0_50 = arith.constant 0 : index
      %211 = vector.load %arg6[%210, %c0_50] : memref<288x128xf32, #tpu.memory_space<vmem>>, vector<8x128xf32>
      tpu.vector_store %arg6[%210, %c0_50], %187 {strides = array<i32>} : memref<288x128xf32, #tpu.memory_space<vmem>>, vector<8x128xf32>,
    }
    %c4_i32_8 = arith.constant 4 : i32
    %c0_9 = arith.constant 0 : index
    %c0_10 = arith.constant 0 : index
    %7 = vector.load %arg6[%c0_9, %c0_10] : memref<288x128xf32, #tpu.memory_space<vmem>>, vector<288x128xf32>
    %8 = arith.truncf %7 : vector<288x128xf32> to vector<288x128xbf16>
    %c0_11 = arith.constant 0 : index
    %c0_12 = arith.constant 0 : index
    %9 = vector.load %arg3[%c0_11, %c0_12] : memref<8x288xbf16, #tpu.memory_space<vmem>>, vector<8x288xbf16>
    %cst_13 = arith.constant dense<0.000000e+00> : vector<8x128xf32>
    %10 = tpu.matmul %9, %8, %cst_13 {dimension_numbers = #tpu.dot_dimension_numbers<[1], [0], [0], [1], [0, 0, 1, 1], [], []>} : vector<8x288xbf16>, vector<288x128xbf16>, vector<8x128xf32> -> vector<8x128xf32>
    %c0_14 = arith.constant 0 : index
    %c0_15 = arith.constant 0 : index
    %11 = vector.load %arg5[%c0_14, %c0_15] : memref<8x128xf32, #tpu.memory_space<vmem>>, vector<8x128xf32>
    tpu.vector_store %arg5[%c0_14, %c0_15], %10 {strides = array<i32>} : memref<8x128xf32, #tpu.memory_space<vmem>>, vector<8x128xf32>,
    return
  }
  func.func @transform_0(%arg0: i32) -> (i32, i32) {
    %c0_i32 = arith.constant 0 : i32
    %c0_i32_0 = arith.constant 0 : i32
    return %c0_i32, %arg0 : i32, i32
  }
  func.func @transform_1(%arg0: i32) -> (i32, i32) {
    %c0_i32 = arith.constant 0 : i32
    %c0_i32_0 = arith.constant 0 : i32
    %c0_i32_1 = arith.constant 0 : i32
    return %c0_i32, %c0_i32_0 : i32, i32
  }
  func.func @transform_2(%arg0: i32) -> (i32, i32) {
    %c0_i32 = arith.constant 0 : i32
    %c0_i32_0 = arith.constant 0 : i32
    %c0_i32_1 = arith.constant 0 : i32
    return %c0_i32, %c0_i32_0 : i32, i32
  }
  func.func @transform_3(%arg0: i32) -> (i32, i32) {
    %c0_i32 = arith.constant 0 : i32
    %c0_i32_0 = arith.constant 0 : i32
    return %c0_i32, %arg0 : i32, i32
  }
  func.func @transform_4(%arg0: i32) -> (i32, i32) {
    %c0_i32 = arith.constant 0 : i32
    %c0_i32_0 = arith.constant 0 : i32
    return %c0_i32, %arg0 : i32, i32
  }
}

</mosaic_0001>

<llo_original>
// kernel: tpu_custom_call.1
$region0: #{tpu_custom_call.1}
  #allocation0 [shape = 'u32[]', space=smem, size = 0x4, offset = 0x4, fixed_abs, tag = 'smem constant byte address 0x4 - core index']
  #allocation1 [shape = 'u32[72,128]{1,0:T(1,128)}', space=vmem, size = 0x9000, scoped, tag = 'internal scratch']
  #allocation2 [shape = 'f32[288,128]{1,0:T(8,128)}', space=vmem, size = 0x24000, scoped, tag = 'scratch operand']
  %s0 = inlined_call_operand.hbm [shape: f32[16,128], index: 0, kind: input, shape index: {}]
  %s1 = inlined_call_operand.hbm [shape: bf16[32,144], index: 1, kind: input, shape index: {}]
  %s2 = inlined_call_operand.hbm [shape: bf16[8,288], index: 2, kind: input, shape index: {}]
  %s3 = inlined_call_operand.hbm [shape: f32[32,128], index: 3, kind: output, shape index: {0}]
  %s4 = inlined_call_operand.hbm [shape: f32[8,128], index: 4, kind: output, shape index: {1}]
  %5 = xla_tuple %s3, %s4
  %s6 = sld [smem:[#allocation0]]
  $region56: #{tpu_custom_call.1} parent=0
    _
  %s8 = ssub.s32 1, %s6
  %s9 = scalar_select 0, %s8, %s6
  $region1: #{tpu_custom_call.1} parent=0
    #allocation3 [shape = 'u8[8192]{0}', space=vmem, size = 0x2000, scoped, tag = 'input window, operand 0, single buffered']
    #allocation4 [shape = 's32[1]{0}', space=sflag, size = 0x4, scoped, tag = 'scoped memory for tpu_custom_call.1']
    #allocation5 [shape = 's32[1]{0}', space=sflag, size = 0x4, scoped, tag = 'scoped memory for tpu_custom_call.1']
    #allocation6 [shape = 'u8[16384]{0}', space=vmem, size = 0x4000, scoped, tag = 'input window, operand 1, single buffered']
    #allocation7 [shape = 's32[1]{0}', space=sflag, size = 0x4, scoped, tag = 'scoped memory for tpu_custom_call.1']
    #allocation8 [shape = 'u8[6144]{0}', space=vmem, size = 0x1800, scoped, tag = 'input window, operand 2, single buffered']
    #allocation9 [shape = 'u8[16384]{0}', space=vmem, size = 0x4000, scoped, tag = 'output window, operand 0, single buffered']
    #allocation10 [shape = 'u8[4096]{0}', space=vmem, size = 0x1000, scoped, tag = 'output window, operand 1, single buffered']
    #allocation11 [shape = 's32[1]{0}', space=sflag, size = 0x4, scoped, tag = 'scoped memory for tpu_custom_call.1']
    %10 = vsyncpa [#allocation4], 0
    %11 = vsyncpa [#allocation7], 0
    %12 = vsyncpa [#allocation5], 0
    %13 = vsyncpa [#allocation11], 0
    // Predicated region
    $region2: #{tpu_custom_call.1} parent=1 // pred_check
      _
    $region3: #{tpu_custom_call.1} parent=1 // pred_check_branch
      %15 = sbr.rel (0) target = $region5
    $region4: #{tpu_custom_call.1} parent=1 // pred_region
      %17 = vsyncadd [#allocation4], 0
      %s18 = sshll.u32 %s0, 4
      %s19 = int_to_ptr.hbm [resolvable:$true] %s18
      %s20 = sshll.u32 [#allocation3], 4
      %s21 = int_to_ptr.vmem [resolvable:$true] %s20
      %26 = dma.hbm_to_vmem [thread:$0]  %s19, 256, %s21, [#allocation4], 128, 128, 8
    $region5: #{tpu_custom_call.1} parent=1 // pred_fallthru
      _
    // Predicated region
    $region6: #{tpu_custom_call.1} parent=1 // pred_check
      _
    $region7: #{tpu_custom_call.1} parent=1 // pred_check_branch
      %28 = sbr.rel (0) target = $region9
    $region8: #{tpu_custom_call.1} parent=1 // pred_region
      %30 = vsyncadd [#allocation7], 0
      %s31 = sshll.u32 %s1, 4
      %s32 = int_to_ptr.hbm [resolvable:$true] %s31
      %s33 = sshll.u32 [#allocation6], 4
      %s34 = int_to_ptr.vmem [resolvable:$true] %s33
      %39 = dma.hbm_to_vmem [thread:$0]  %s32, 512, %s34, [#allocation7], 128, 128, 8
    $region9: #{tpu_custom_call.1} parent=1 // pred_fallthru
      _
    // Predicated region
    $region10: #{tpu_custom_call.1} parent=1 // pred_check
      _
    $region11: #{tpu_custom_call.1} parent=1 // pred_check_branch
      %41 = sbr.rel (0) target = $region13
    $region12: #{tpu_custom_call.1} parent=1 // pred_region
      %43 = vsyncadd [#allocation7], 0
      %s45 = sshll.u32 %s2, 4
      %s46 = int_to_ptr.hbm [resolvable:$true] %s45
      %s47 = sshll.u32 [#allocation8], 4
      %s48 = int_to_ptr.vmem [resolvable:$true] %s47
      %50 = dma.hbm_to_vmem [thread:$0]  %s46, 192, %s48, [#allocation7]
    $region13: #{tpu_custom_call.1} parent=1 // pred_fallthru
      _
    // Predicated region
    $region14: #{tpu_custom_call.1} parent=1 // pred_check
      _
    $region15: #{tpu_custom_call.1} parent=1 // pred_check_branch
      %52 = sbr.rel (0) target = $region17
    $region16: #{tpu_custom_call.1} parent=1 // pred_region
      %54 = dma.done [#allocation4], 256
    $region17: #{tpu_custom_call.1} parent=1 // pred_fallthru
      _
    // Predicated region
    $region18: #{tpu_custom_call.1} parent=1 // pred_check
      _
    $region19: #{tpu_custom_call.1} parent=1 // pred_check_branch
      %56 = sbr.rel (0) target = $region21
    $region20: #{tpu_custom_call.1} parent=1 // pred_region
      %58 = dma.done [#allocation7], 512
    $region21: #{tpu_custom_call.1} parent=1 // pred_fallthru
      _
    // Predicated region
    $region22: #{tpu_custom_call.1} parent=1 // pred_check
      _
    $region23: #{tpu_custom_call.1} parent=1 // pred_check_branch
      %60 = sbr.rel (0) target = $region25
    $region24: #{tpu_custom_call.1} parent=1 // pred_region
      %62 = dma.done [#allocation7], 192
    $region25: #{tpu_custom_call.1} parent=1 // pred_fallthru
      _
    loop: start=0, step=1, limit=2
    $region26: #{tpu_custom_call.1} parent=1 // loop_pre_header
      _
    $region27: #{tpu_custom_call.1} parent=1 // loop_header
      %s65 = sphi 0, %s69
      %p66 = scmp.ge.s32.totalorder %s65, 2
    $region28: #{tpu_custom_call.1} parent=1 // loop_header_branch
      %68 = sbr.rel (%p66) target = $region32
    $region29: #{tpu_custom_call.1} parent=1 // loop_body
      %s70 = smul.u32 %s65, 8
      %s71 = scalar_lea.vmem [#allocation3], %s70
      %v72 = vld [vmem:[%s71] sm:$0xff]
      %v73 = vxor.u32 %v72, 2147483648
      %v74 = vmul.f32 %v73, 1.442695
      %v75 = vpow.pop %v74
      %v76 = vadd.f32 %v75, 1.0
      %v77 = vrcp.pop %v76
      %v78 = vmul.f32 %v76, %v77
      %v79 = vsub.f32 1.0, %v78
      %v80 = vmul.f32 %v77, %v79
      %v81 = vadd.f32 %v77, %v80
      %vm82 = vweird.f32 %v76
      %vm83 = vweird.f32 %v77
      %vm84 = vmor %vm82, %vm83
      %v85 = vsel %vm84, %v77, %v81
      %v86 = vand.u32 2147483647, %v76
      %vm87 = vcmp.eq.f32.partialorder %v86, 8.507059e+37
      %v88 = vand.u32 %v76, 2147483648
      %v89 = vor.u32 1.1754944e-38, %v88
      %v90 = vsel %vm87, %v89, %v85
      %v91 = vmul.f32 1.0, %v90
      %v92 = vmul.f32 %v72, %v91
      %s93 = scalar_lea.vmem [#allocation2], %s70
      %94 = vst [vmem:[%s93] sm:$0xff] %v92
      %vm95 = vcmp.ge.f32.partialorder %v72, -2.2
      %v96 = vsel %vm95, 1, 0
      %v97 = vcvt.s32.f32 %v96
      %vm98 = vcmp.ge.f32.partialorder %v72, -1.8
      %v99 = vsel %vm98, 1, 0
      %v100 = vcvt.s32.f32 %v99
      %vm101 = vcmp.ge.f32.partialorder %v72, -1.4
      %v102 = vsel %vm101, 1, 0
      %v103 = vcvt.s32.f32 %v102
      %vm104 = vcmp.ge.f32.partialorder %v72, -1.0
      %v105 = vsel %vm104, 1, 0
      %v106 = vcvt.s32.f32 %v105
      %vm107 = vcmp.ge.f32.partialorder %v72, -0.6
      %v108 = vsel %vm107, 1, 0
      %v109 = vcvt.s32.f32 %v108
      %vm110 = vcmp.ge.f32.partialorder %v72, -0.2
      %v111 = vsel %vm110, 1, 0
      %v112 = vcvt.s32.f32 %v111
      %vm113 = vcmp.ge.f32.partialorder %v72, 0.2
      %v114 = vsel %vm113, 1, 0
      %v115 = vcvt.s32.f32 %v114
      %vm116 = vcmp.ge.f32.partialorder %v72, 0.6
      %v117 = vsel %vm116, 1, 0
      %v118 = vcvt.s32.f32 %v117
      %vm119 = vcmp.ge.f32.partialorder %v72, 1.0
      %v120 = vsel %vm119, 1, 0
      %v121 = vcvt.s32.f32 %v120
      %vm122 = vcmp.ge.f32.partialorder %v72, 1.4
      %v123 = vsel %vm122, 1, 0
      %v124 = vcvt.s32.f32 %v123
      %vm125 = vcmp.ge.f32.partialorder %v72, 1.8
      %v126 = vsel %vm125, 1, 0
      %v127 = vcvt.s32.f32 %v126
      %vm128 = vcmp.ge.f32.partialorder %v72, 2.2
      %v129 = vsel %vm128, 1, 0
      %v130 = vcvt.s32.f32 %v129
      %v131 = vsub.f32 %v97, %v100
      %v132 = vsub.f32 %v100, %v103
      %v133 = vsub.f32 %v103, %v106
      %v134 = vsub.f32 %v106, %v109
      %v135 = vsub.f32 %v109, %v112
      %v136 = vsub.f32 %v112, %v115
      %v137 = vsub.f32 %v115, %v118
      %v138 = vsub.f32 %v118, %v121
      %v139 = vsub.f32 %v121, %v124
      %v140 = vsub.f32 %v124, %v127
      %v141 = vsub.f32 %v127, %v130
      %v142 = vsub.f32 %v72, -2.2
      %v143 = vsub.f32 %v72, -1.8
      %v144 = vsub.f32 %v72, -1.4
      %v145 = vsub.f32 %v72, -1.0
      %v146 = vsub.f32 %v72, -0.6
      %v147 = vsub.f32 %v72, -0.2
      %v148 = vsub.f32 %v72, 0.2
      %v149 = vsub.f32 %v72, 0.6
      %v150 = vsub.f32 %v72, 1.0
      %v151 = vsub.f32 %v72, 1.4
      %v152 = vsub.f32 %v72, 1.8
      %v153 = vsub.f32 %v72, 2.2
      %v154 = vmul.f32 %v142, %v131
      %v155 = vmul.f32 %v144, %v132
      %v156 = vsub.f32 %v154, %v155
      %v157 = vmul.f32 %v143, %v132
      %v158 = vmul.f32 %v145, %v133
      %v159 = vsub.f32 %v157, %v158
      %v160 = vmul.f32 %v144, %v133
      %v161 = vmul.f32 %v146, %v134
      %v162 = vsub.f32 %v160, %v161
      %v163 = vmul.f32 %v145, %v134
      %v164 = vmul.f32 %v147, %v135
      %v165 = vsub.f32 %v163, %v164
      %v166 = vmul.f32 %v146, %v135
      %v167 = vmul.f32 %v148, %v136
      %v168 = vsub.f32 %v166, %v167
      %v169 = vmul.f32 %v147, %v136
      %v170 = vmul.f32 %v149, %v137
      %v171 = vsub.f32 %v169, %v170
      %v172 = vmul.f32 %v148, %v137
      %v173 = vmul.f32 %v150, %v138
      %v174 = vsub.f32 %v172, %v173
      %v175 = vmul.f32 %v149, %v138
      %v176 = vmul.f32 %v151, %v139
      %v177 = vsub.f32 %v175, %v176
      %v178 = vmul.f32 %v150, %v139
      %v179 = vmul.f32 %v152, %v140
      %v180 = vsub.f32 %v178, %v179
      %v181 = vmul.f32 %v151, %v140
      %v182 = vmul.f32 %v153, %v141
      %v183 = vsub.f32 %v181, %v182
      %v184 = vmul.f32 %v142, %v156
      %v185 = vmul.f32 %v145, %v159
      %v186 = vsub.f32 %v184, %v185
      %v187 = vmul.f32 %v143, %v159
      %v188 = vmul.f32 %v146, %v162
      %v189 = vsub.f32 %v187, %v188
      %v190 = vmul.f32 %v144, %v162
      %v191 = vmul.f32 %v147, %v165
      %v192 = vsub.f32 %v190, %v191
      %v193 = vmul.f32 %v145, %v165
      %v194 = vmul.f32 %v148, %v168
      %v195 = vsub.f32 %v193, %v194
      %v196 = vmul.f32 %v146, %v168
      %v197 = vmul.f32 %v149, %v171
      %v198 = vsub.f32 %v196, %v197
      %v199 = vmul.f32 %v147, %v171
      %v200 = vmul.f32 %v150, %v174
      %v201 = vsub.f32 %v199, %v200
      %v202 = vmul.f32 %v148, %v174
      %v203 = vmul.f32 %v151, %v177
      %v204 = vsub.f32 %v202, %v203
      %v205 = vmul.f32 %v149, %v177
      %v206 = vmul.f32 %v152, %v180
      %v207 = vsub.f32 %v205, %v206
      %v208 = vmul.f32 %v150, %v180
      %v209 = vmul.f32 %v153, %v183
      %v210 = vsub.f32 %v208, %v209
      %v211 = vmul.f32 %v142, %v186
      %v212 = vmul.f32 %v146, %v189
      %v213 = vsub.f32 %v211, %v212
      %v214 = vmul.f32 %v143, %v189
      %v215 = vmul.f32 %v147, %v192
      %v216 = vsub.f32 %v214, %v215
      %v217 = vmul.f32 %v144, %v192
      %v218 = vmul.f32 %v148, %v195
      %v219 = vsub.f32 %v217, %v218
      %v220 = vmul.f32 %v145, %v195
      %v221 = vmul.f32 %v149, %v198
      %v222 = vsub.f32 %v220, %v221
      %v223 = vmul.f32 %v146, %v198
      %v224 = vmul.f32 %v150, %v201
      %v225 = vsub.f32 %v223, %v224
      %v226 = vmul.f32 %v147, %v201
      %v227 = vmul.f32 %v151, %v204
      %v228 = vsub.f32 %v226, %v227
      %v229 = vmul.f32 %v148, %v204
      %v230 = vmul.f32 %v152, %v207
      %v231 = vsub.f32 %v229, %v230
      %v232 = vmul.f32 %v149, %v207
      %v233 = vmul.f32 %v153, %v210
      %v234 = vsub.f32 %v232, %v233
      %s235 = sadd.s32 %s70, 16
      %s236 = scalar_lea.vmem [#allocation2], %s235
      %237 = vst [vmem:[%s236] sm:$0xff] %v213
      %s238 = sadd.s32 %s70, 32
      %s239 = scalar_lea.vmem [#allocation2], %s238
      %240 = vst [vmem:[%s239] sm:$0xff] %v216
      %s241 = sadd.s32 %s70, 48
      %s242 = scalar_lea.vmem [#allocation2], %s241
      %243 = vst [vmem:[%s242] sm:$0xff] %v219
      %s244 = sadd.s32 %s70, 64
      %s245 = scalar_lea.vmem [#allocation2], %s244
      %246 = vst [vmem:[%s245] sm:$0xff] %v222
      %s247 = sadd.s32 %s70, 80
      %s248 = scalar_lea.vmem [#allocation2], %s247
      %249 = vst [vmem:[%s248] sm:$0xff] %v225
      %s250 = sadd.s32 %s70, 96
      %s251 = scalar_lea.vmem [#allocation2], %s250
      %252 = vst [vmem:[%s251] sm:$0xff] %v228
      %s253 = sadd.s32 %s70, 112
      %s254 = scalar_lea.vmem [#allocation2], %s253
      %255 = vst [vmem:[%s254] sm:$0xff] %v231
      %s256 = sadd.s32 %s70, 128
      %s257 = scalar_lea.vmem [#allocation2], %s256
      %258 = vst [vmem:[%s257] sm:$0xff] %v234
    $region30: #{tpu_custom_call.1} parent=1 // loop_footer
      %s69 = sadd.s32 1, %s65
    $region31: #{tpu_custom_call.1} parent=1 // loop_footer_branch
      %64 = sbr.rel target = $region27
    $region32: #{tpu_custom_call.1} parent=1 // loop_exit
      _
    %v259 = vld [vmem:[#allocation2] sm:$0xff]
    %v260 = vld [vmem:[#allocation2 + $0x8] sm:$0xff]
    %v261 = vld [vmem:[#allocation2 + $0x10] sm:$0xff]
    %v262 = vld [vmem:[#allocation2 + $0x18] sm:$0xff]
    %v263 = vld [vmem:[#allocation2 + $0x20] sm:$0xff]
    %v264 = vld [vmem:[#allocation2 + $0x28] sm:$0xff]
    %v265 = vld [vmem:[#allocation2 + $0x30] sm:$0xff]
    %v266 = vld [vmem:[#allocation2 + $0x38] sm:$0xff]
    %v267 = vld [vmem:[#allocation2 + $0x40] sm:$0xff]
    %v268 = vld [vmem:[#allocation2 + $0x48] sm:$0xff]
    %v269 = vld [vmem:[#allocation2 + $0x50] sm:$0xff]
    %v270 = vld [vmem:[#allocation2 + $0x58] sm:$0xff]
    %v271 = vld [vmem:[#allocation2 + $0x60] sm:$0xff]
    %v272 = vld [vmem:[#allocation2 + $0x68] sm:$0xff]
    %v273 = vld [vmem:[#allocation2 + $0x70] sm:$0xff]
    %v274 = vld [vmem:[#allocation2 + $0x78] sm:$0xff]
    %v275 = vld [vmem:[#allocation2 + $0x80] sm:$0xff]
    %v276 = vld [vmem:[#allocation2 + $0x88] sm:$0xff]
    %v277 = vpack.c.bf16 %v260, %v259
    %v278 = vpack.c.bf16 %v262, %v261
    %v279 = vpack.c.bf16 %v264, %v263
    %v280 = vpack.c.bf16 %v266, %v265
    %v281 = vpack.c.bf16 %v268, %v267
    %v282 = vpack.c.bf16 %v270, %v269
    %v283 = vpack.c.bf16 %v272, %v271
    %v284 = vpack.c.bf16 %v274, %v273
    %v285 = vpack.c.bf16 %v276, %v275
    %v286 = vld [vmem:[#allocation6] sm:$0xff]
    %v287 = vld [vmem:[#allocation6 + $0x8] sm:$0xff]
    %v288 = vld [vmem:[#allocation6 + $0x10] sm:$0xff]
    %v289 = vld [vmem:[#allocation6 + $0x18] sm:$0xff]
    %v294 = vunpack.c.l.b16 %v286
    %v295 = vunpack.c.h.b16 %v286
    %v296 = vunpack.c.l.b16 %v287
    %v297 = vunpack.c.h.b16 %v287
    %v298 = vunpack.c.l.b16 %v288
    %v299 = vunpack.c.h.b16 %v288
    %v300 = vunpack.c.l.b16 %v289
    %v301 = vunpack.c.h.b16 %v289
    %v302 = vpack.c.b16 %v296, %v294
    %v303 = vpack.c.b16 %v297, %v295
    %v304 = vpack.c.b16 %v300, %v298
    %v305 = vpack.c.b16 %v301, %v299
    %vm308 = vcmask 130048
    %v310 = vsel %vm308, %v303, 0
    %v313 = vsel %vm308, %v305, 0
    %315 = vmatpush.bf16.msra.mxu0 %v284
    %316 = vmatpush.bf16.msra.mxu0 %v283
    %317 = vmatpush.bf16.msra.mxu0 %v282
    %318 = vmatpush.bf16.msra.mxu0 %v281
    %319 = vmatpush.bf16.msra.mxu0 %v280
    %320 = vmatpush.bf16.msra.mxu0 %v279
    %321 = vmatpush.bf16.msra.mxu0 %v278
    %322 = vmatpush.bf16.msra.mxu0 %v277
    %323 = vmatmul.bf16.gmra.mxu0 %v302
    %v324 = vpop.f32.mrf.mxu0
    %v325 = vadd.f32 0.0, %v324
    %v326 = vpop.f32.mrf.mxu0
    %v327 = vadd.f32 0.0, %v326
    %328 = vmatmul.bf16.gmra.mxu0 %v304
    %v329 = vpop.f32.mrf.mxu0
    %v330 = vadd.f32 0.0, %v329
    %v331 = vpop.f32.mrf.mxu0
    %v332 = vadd.f32 0.0, %v331
    %333 = vdwg.mxu0
    %334 = vmatpush.bf16.msra.mxu0 0
    %335 = vmatpush.bf16.msra.mxu0 0
    %336 = vmatpush.bf16.msra.mxu0 0
    %337 = vmatpush.bf16.msra.mxu0 0
    %338 = vmatpush.bf16.msra.mxu0 0
    %339 = vmatpush.bf16.msra.mxu0 0
    %340 = vmatpush.bf16.msra.mxu0 0
    %341 = vmatpush.bf16.msra.mxu0 %v285
    %342 = vmatmul.bf16.gmra.mxu0 %v310
    %v343 = vpop.f32.mrf.mxu0
    %v344 = vadd.f32 %v325, %v343
    %v345 = vpop.f32.mrf.mxu0
    %v346 = vadd.f32 %v327, %v345
    %347 = vmatmul.bf16.gmra.mxu0 %v313
    %v348 = vpop.f32.mrf.mxu0
    %v349 = vadd.f32 %v330, %v348
    %v350 = vpop.f32.mrf.mxu0
    %v351 = vadd.f32 %v332, %v350
    %352 = vdwg.mxu0
    %353 = vst [vmem:[#allocation9] sm:$0xff] %v344
    %354 = vst [vmem:[#allocation9 + $0x8] sm:$0xff] %v346
    %355 = vst [vmem:[#allocation9 + $0x10] sm:$0xff] %v349
    %356 = vst [vmem:[#allocation9 + $0x18] sm:$0xff] %v351
    loop: start=0, step=1, limit=4
    $region33: #{tpu_custom_call.1} parent=1 // loop_pre_header
      _
    $region34: #{tpu_custom_call.1} parent=1 // loop_header
      %s358 = sphi 0, %s362
      %p359 = scmp.ge.s32.totalorder %s358, 4
    $region35: #{tpu_custom_call.1} parent=1 // loop_header_branch
      %361 = sbr.rel (%p359) target = $region39
    $region36: #{tpu_custom_call.1} parent=1 // loop_body
      %s363 = smul.u32 %s358, 8
      %s364 = scalar_lea.vmem [#allocation9], %s363
      %v365 = vld [vmem:[%s364] sm:$0xff]
      %v366 = vxor.u32 %v365, 2147483648
      %v367 = vmul.f32 %v366, 1.442695
      %v368 = vpow.pop %v367
      %v369 = vadd.f32 %v368, 1.0
      %v370 = vrcp.pop %v369
      %v371 = vmul.f32 %v369, %v370
      %v372 = vsub.f32 1.0, %v371
      %v373 = vmul.f32 %v370, %v372
      %v374 = vadd.f32 %v370, %v373
      %vm375 = vweird.f32 %v369
      %vm376 = vweird.f32 %v370
      %vm377 = vmor %vm375, %vm376
      %v378 = vsel %vm377, %v370, %v374
      %v379 = vand.u32 2147483647, %v369
      %vm380 = vcmp.eq.f32.partialorder %v379, 8.507059e+37
      %v381 = vand.u32 %v369, 2147483648
      %v382 = vor.u32 1.1754944e-38, %v381
      %v383 = vsel %vm380, %v382, %v378
      %v384 = vmul.f32 1.0, %v383
      %v385 = vmul.f32 %v365, %v384
      %s386 = scalar_lea.vmem [#allocation2], %s363
      %387 = vst [vmem:[%s386] sm:$0xff] %v385
      %vm388 = vcmp.ge.f32.partialorder %v365, -2.2
      %v389 = vsel %vm388, 1, 0
      %v390 = vcvt.s32.f32 %v389
      %vm391 = vcmp.ge.f32.partialorder %v365, -1.8
      %v392 = vsel %vm391, 1, 0
      %v393 = vcvt.s32.f32 %v392
      %vm394 = vcmp.ge.f32.partialorder %v365, -1.4
      %v395 = vsel %vm394, 1, 0
      %v396 = vcvt.s32.f32 %v395
      %vm397 = vcmp.ge.f32.partialorder %v365, -1.0
      %v398 = vsel %vm397, 1, 0
      %v399 = vcvt.s32.f32 %v398
      %vm400 = vcmp.ge.f32.partialorder %v365, -0.6
      %v401 = vsel %vm400, 1, 0
      %v402 = vcvt.s32.f32 %v401
      %vm403 = vcmp.ge.f32.partialorder %v365, -0.2
      %v404 = vsel %vm403, 1, 0
      %v405 = vcvt.s32.f32 %v404
      %vm406 = vcmp.ge.f32.partialorder %v365, 0.2
      %v407 = vsel %vm406, 1, 0
      %v408 = vcvt.s32.f32 %v407
      %vm409 = vcmp.ge.f32.partialorder %v365, 0.6
      %v410 = vsel %vm409, 1, 0
      %v411 = vcvt.s32.f32 %v410
      %vm412 = vcmp.ge.f32.partialorder %v365, 1.0
      %v413 = vsel %vm412, 1, 0
      %v414 = vcvt.s32.f32 %v413
      %vm415 = vcmp.ge.f32.partialorder %v365, 1.4
      %v416 = vsel %vm415, 1, 0
      %v417 = vcvt.s32.f32 %v416
      %vm418 = vcmp.ge.f32.partialorder %v365, 1.8
      %v419 = vsel %vm418, 1, 0
      %v420 = vcvt.s32.f32 %v419
      %vm421 = vcmp.ge.f32.partialorder %v365, 2.2
      %v422 = vsel %vm421, 1, 0
      %v423 = vcvt.s32.f32 %v422
      %v424 = vsub.f32 %v390, %v393
      %v425 = vsub.f32 %v393, %v396
      %v426 = vsub.f32 %v396, %v399
      %v427 = vsub.f32 %v399, %v402
      %v428 = vsub.f32 %v402, %v405
      %v429 = vsub.f32 %v405, %v408
      %v430 = vsub.f32 %v408, %v411
      %v431 = vsub.f32 %v411, %v414
      %v432 = vsub.f32 %v414, %v417
      %v433 = vsub.f32 %v417, %v420
      %v434 = vsub.f32 %v420, %v423
      %v435 = vsub.f32 %v365, -2.2
      %v436 = vsub.f32 %v365, -1.8
      %v437 = vsub.f32 %v365, -1.4
      %v438 = vsub.f32 %v365, -1.0
      %v439 = vsub.f32 %v365, -0.6
      %v440 = vsub.f32 %v365, -0.2
      %v441 = vsub.f32 %v365, 0.2
      %v442 = vsub.f32 %v365, 0.6
      %v443 = vsub.f32 %v365, 1.0
      %v444 = vsub.f32 %v365, 1.4
      %v445 = vsub.f32 %v365, 1.8
      %v446 = vsub.f32 %v365, 2.2
      %v447 = vmul.f32 %v435, %v424
      %v448 = vmul.f32 %v437, %v425
      %v449 = vsub.f32 %v447, %v448
      %v450 = vmul.f32 %v436, %v425
      %v451 = vmul.f32 %v438, %v426
      %v452 = vsub.f32 %v450, %v451
      %v453 = vmul.f32 %v437, %v426
      %v454 = vmul.f32 %v439, %v427
      %v455 = vsub.f32 %v453, %v454
      %v456 = vmul.f32 %v438, %v427
      %v457 = vmul.f32 %v440, %v428
      %v458 = vsub.f32 %v456, %v457
      %v459 = vmul.f32 %v439, %v428
      %v460 = vmul.f32 %v441, %v429
      %v461 = vsub.f32 %v459, %v460
      %v462 = vmul.f32 %v440, %v429
      %v463 = vmul.f32 %v442, %v430
      %v464 = vsub.f32 %v462, %v463
      %v465 = vmul.f32 %v441, %v430
      %v466 = vmul.f32 %v443, %v431
      %v467 = vsub.f32 %v465, %v466
      %v468 = vmul.f32 %v442, %v431
      %v469 = vmul.f32 %v444, %v432
      %v470 = vsub.f32 %v468, %v469
      %v471 = vmul.f32 %v443, %v432
      %v472 = vmul.f32 %v445, %v433
      %v473 = vsub.f32 %v471, %v472
      %v474 = vmul.f32 %v444, %v433
      %v475 = vmul.f32 %v446, %v434
      %v476 = vsub.f32 %v474, %v475
      %v477 = vmul.f32 %v435, %v449
      %v478 = vmul.f32 %v438, %v452
      %v479 = vsub.f32 %v477, %v478
      %v480 = vmul.f32 %v436, %v452
      %v481 = vmul.f32 %v439, %v455
      %v482 = vsub.f32 %v480, %v481
      %v483 = vmul.f32 %v437, %v455
      %v484 = vmul.f32 %v440, %v458
      %v485 = vsub.f32 %v483, %v484
      %v486 = vmul.f32 %v438, %v458
      %v487 = vmul.f32 %v441, %v461
      %v488 = vsub.f32 %v486, %v487
      %v489 = vmul.f32 %v439, %v461
      %v490 = vmul.f32 %v442, %v464
      %v491 = vsub.f32 %v489, %v490
      %v492 = vmul.f32 %v440, %v464
      %v493 = vmul.f32 %v443, %v467
      %v494 = vsub.f32 %v492, %v493
      %v495 = vmul.f32 %v441, %v467
      %v496 = vmul.f32 %v444, %v470
      %v497 = vsub.f32 %v495, %v496
      %v498 = vmul.f32 %v442, %v470
      %v499 = vmul.f32 %v445, %v473
      %v500 = vsub.f32 %v498, %v499
      %v501 = vmul.f32 %v443, %v473
      %v502 = vmul.f32 %v446, %v476
      %v503 = vsub.f32 %v501, %v502
      %v504 = vmul.f32 %v435, %v479
      %v505 = vmul.f32 %v439, %v482
      %v506 = vsub.f32 %v504, %v505
      %v507 = vmul.f32 %v436, %v482
      %v508 = vmul.f32 %v440, %v485
      %v509 = vsub.f32 %v507, %v508
      %v510 = vmul.f32 %v437, %v485
      %v511 = vmul.f32 %v441, %v488
      %v512 = vsub.f32 %v510, %v511
      %v513 = vmul.f32 %v438, %v488
      %v514 = vmul.f32 %v442, %v491
      %v515 = vsub.f32 %v513, %v514
      %v516 = vmul.f32 %v439, %v491
      %v517 = vmul.f32 %v443, %v494
      %v518 = vsub.f32 %v516, %v517
      %v519 = vmul.f32 %v440, %v494
      %v520 = vmul.f32 %v444, %v497
      %v521 = vsub.f32 %v519, %v520
      %v522 = vmul.f32 %v441, %v497
      %v523 = vmul.f32 %v445, %v500
      %v524 = vsub.f32 %v522, %v523
      %v525 = vmul.f32 %v442, %v500
      %v526 = vmul.f32 %v446, %v503
      %v527 = vsub.f32 %v525, %v526
      %s528 = sadd.s32 %s363, 32
      %s529 = scalar_lea.vmem [#allocation2], %s528
      %530 = vst [vmem:[%s529] sm:$0xff] %v506
      %s531 = sadd.s32 %s363, 64
      %s532 = scalar_lea.vmem [#allocation2], %s531
      %533 = vst [vmem:[%s532] sm:$0xff] %v509
      %s534 = sadd.s32 %s363, 96
      %s535 = scalar_lea.vmem [#allocation2], %s534
      %536 = vst [vmem:[%s535] sm:$0xff] %v512
      %s537 = sadd.s32 %s363, 128
      %s538 = scalar_lea.vmem [#allocation2], %s537
      %539 = vst [vmem:[%s538] sm:$0xff] %v515
      %s540 = sadd.s32 %s363, 160
      %s541 = scalar_lea.vmem [#allocation2], %s540
      %542 = vst [vmem:[%s541] sm:$0xff] %v518
      %s543 = sadd.s32 %s363, 192
      %s544 = scalar_lea.vmem [#allocation2], %s543
      %545 = vst [vmem:[%s544] sm:$0xff] %v521
      %s546 = sadd.s32 %s363, 224
      %s547 = scalar_lea.vmem [#allocation2], %s546
      %548 = vst [vmem:[%s547] sm:$0xff] %v524
      %s549 = sadd.s32 %s363, 256
      %s550 = scalar_lea.vmem [#allocation2], %s549
      %551 = vst [vmem:[%s550] sm:$0xff] %v527
    $region37: #{tpu_custom_call.1} parent=1 // loop_footer
      %s362 = sadd.s32 1, %s358
    $region38: #{tpu_custom_call.1} parent=1 // loop_footer_branch
      %357 = sbr.rel target = $region34
    $region39: #{tpu_custom_call.1} parent=1 // loop_exit
      _
    %v552 = vld [vmem:[#allocation2] sm:$0xff]
    %v553 = vld [vmem:[#allocation2 + $0x8] sm:$0xff]
    %v554 = vld [vmem:[#allocation2 + $0x10] sm:$0xff]
    %v555 = vld [vmem:[#allocation2 + $0x18] sm:$0xff]
    %v556 = vld [vmem:[#allocation2 + $0x20] sm:$0xff]
    %v557 = vld [vmem:[#allocation2 + $0x28] sm:$0xff]
    %v558 = vld [vmem:[#allocation2 + $0x30] sm:$0xff]
    %v559 = vld [vmem:[#allocation2 + $0x38] sm:$0xff]
    %v560 = vld [vmem:[#allocation2 + $0x40] sm:$0xff]
    %v561 = vld [vmem:[#allocation2 + $0x48] sm:$0xff]
    %v562 = vld [vmem:[#allocation2 + $0x50] sm:$0xff]
    %v563 = vld [vmem:[#allocation2 + $0x58] sm:$0xff]
    %v564 = vld [vmem:[#allocation2 + $0x60] sm:$0xff]
    %v565 = vld [vmem:[#allocation2 + $0x68] sm:$0xff]
    %v566 = vld [vmem:[#allocation2 + $0x70] sm:$0xff]
    %v567 = vld [vmem:[#allocation2 + $0x78] sm:$0xff]
    %v568 = vld [vmem:[#allocation2 + $0x80] sm:$0xff]
    %v569 = vld [vmem:[#allocation2 + $0x88] sm:$0xff]
    %v570 = vld [vmem:[#allocation2 + $0x90] sm:$0xff]
    %v571 = vld [vmem:[#allocation2 + $0x98] sm:$0xff]
    %v572 = vld [vmem:[#allocation2 + $0xa0] sm:$0xff]
    %v573 = vld [vmem:[#allocation2 + $0xa8] sm:$0xff]
    %v574 = vld [vmem:[#allocation2 + $0xb0] sm:$0xff]
    %v575 = vld [vmem:[#allocation2 + $0xb8] sm:$0xff]
    %v576 = vld [vmem:[#allocation2 + $0xc0] sm:$0xff]
    %v577 = vld [vmem:[#allocation2 + $0xc8] sm:$0xff]
    %v578 = vld [vmem:[#allocation2 + $0xd0] sm:$0xff]
    %v579 = vld [vmem:[#allocation2 + $0xd8] sm:$0xff]
    %v580 = vld [vmem:[#allocation2 + $0xe0] sm:$0xff]
    %v581 = vld [vmem:[#allocation2 + $0xe8] sm:$0xff]
    %v582 = vld [vmem:[#allocation2 + $0xf0] sm:$0xff]
    %v583 = vld [vmem:[#allocation2 + $0xf8] sm:$0xff]
    %v584 = vld [vmem:[#allocation2 + $0x100] sm:$0xff]
    %v585 = vld [vmem:[#allocation2 + $0x108] sm:$0xff]
    %v586 = vld [vmem:[#allocation2 + $0x110] sm:$0xff]
    %v587 = vld [vmem:[#allocation2 + $0x118] sm:$0xff]
    %v588 = vpack.c.bf16 %v553, %v552
    %v589 = vpack.c.bf16 %v555, %v554
    %v590 = vpack.c.bf16 %v557, %v556
    %v591 = vpack.c.bf16 %v559, %v558
    %v592 = vpack.c.bf16 %v561, %v560
    %v593 = vpack.c.bf16 %v563, %v562
    %v594 = vpack.c.bf16 %v565, %v564
    %v595 = vpack.c.bf16 %v567, %v566
    %v596 = vpack.c.bf16 %v569, %v568
    %v597 = vpack.c.bf16 %v571, %v570
    %v598 = vpack.c.bf16 %v573, %v572
    %v599 = vpack.c.bf16 %v575, %v574
    %v600 = vpack.c.bf16 %v577, %v576
    %v601 = vpack.c.bf16 %v579, %v578
    %v602 = vpack.c.bf16 %v581, %v580
    %v603 = vpack.c.bf16 %v583, %v582
    %v604 = vpack.c.bf16 %v585, %v584
    %v605 = vpack.c.bf16 %v587, %v586
    %v606 = vld [vmem:[#allocation8] sm:$0xff]
    %v607 = vld [vmem:[#allocation8 + $0x8] sm:$0xf]
    %v610 = vunpack.c.l.b16 %v606
    %v611 = vunpack.c.h.b16 %v606
    %v612 = vunpack.c.l.b16 %v607
    %v613 = vpack.c.b16 %v610, %v610
    %v614 = vpack.c.b16 %v611, %v611
    %v615 = vpack.c.b16 %v612, %v612
    %vm618 = vcmask 261120
    %v620 = vsel %vm618, %v615, 0
    %622 = vmatpush.bf16.msra.mxu0 %v595
    %623 = vmatpush.bf16.msra.mxu0 %v594
    %624 = vmatpush.bf16.msra.mxu0 %v593
    %625 = vmatpush.bf16.msra.mxu0 %v592
    %626 = vmatpush.bf16.msra.mxu0 %v591
    %627 = vmatpush.bf16.msra.mxu0 %v590
    %628 = vmatpush.bf16.msra.mxu0 %v589
    %629 = vmatpush.bf16.msra.mxu0 %v588
    %630 = vmatmul.bf16.gmra.mxu0 %v613
    %v631 = vpop.f32.mrf.mxu0
    %v632 = vadd.f32 0.0, %v631
    %v633 = vpop.f32.mrf.mxu0
    %634 = vdwg.mxu0
    %635 = vmatpush.bf16.msra.mxu0 %v603
    %636 = vmatpush.bf16.msra.mxu0 %v602
    %637 = vmatpush.bf16.msra.mxu0 %v601
    %638 = vmatpush.bf16.msra.mxu0 %v600
    %639 = vmatpush.bf16.msra.mxu0 %v599
    %640 = vmatpush.bf16.msra.mxu0 %v598
    %641 = vmatpush.bf16.msra.mxu0 %v597
    %642 = vmatpush.bf16.msra.mxu0 %v596
    %643 = vmatmul.bf16.gmra.mxu0 %v614
    %v644 = vpop.f32.mrf.mxu0
    %v645 = vadd.f32 %v632, %v644
    %v646 = vpop.f32.mrf.mxu0
    %647 = vdwg.mxu0
    %648 = vmatpush.bf16.msra.mxu0 0
    %649 = vmatpush.bf16.msra.mxu0 0
    %650 = vmatpush.bf16.msra.mxu0 0
    %651 = vmatpush.bf16.msra.mxu0 0
    %652 = vmatpush.bf16.msra.mxu0 0
    %653 = vmatpush.bf16.msra.mxu0 0
    %654 = vmatpush.bf16.msra.mxu0 %v605
    %655 = vmatpush.bf16.msra.mxu0 %v604
    %656 = vmatmul.bf16.gmra.mxu0 %v620
    %v657 = vpop.f32.mrf.mxu0
    %v658 = vadd.f32 %v645, %v657
    %v659 = vpop.f32.mrf.mxu0
    %660 = vdwg.mxu0
    %661 = vst [vmem:[#allocation10] sm:$0xff] %v658
    // Predicated region
    $region40: #{tpu_custom_call.1} parent=1 // pred_check
      _
    $region41: #{tpu_custom_call.1} parent=1 // pred_check_branch
      %663 = sbr.rel (0) target = $region43
    $region42: #{tpu_custom_call.1} parent=1 // pred_region
      %665 = vsyncadd [#allocation5], 0
      %s666 = sshll.u32 [#allocation9], 4
      %s667 = int_to_ptr.vmem [resolvable:$true] %s666
      %s668 = sshll.u32 %s3, 4
      %s669 = int_to_ptr.hbm [resolvable:$true] %s668
      %674 = dma.vmem_to_hbm [thread:$0]  %s667, 512, %s669, [#allocation5], 128, 128, 8
    $region43: #{tpu_custom_call.1} parent=1 // pred_fallthru
      _
    // Predicated region
    $region44: #{tpu_custom_call.1} parent=1 // pred_check
      _
    $region45: #{tpu_custom_call.1} parent=1 // pred_check_branch
      %676 = sbr.rel (0) target = $region47
    $region46: #{tpu_custom_call.1} parent=1 // pred_region
      %678 = vsyncadd [#allocation11], 0
      %s680 = sshll.u32 [#allocation10], 4
      %s681 = int_to_ptr.vmem [resolvable:$true] %s680
      %s682 = sshll.u32 %s4, 4
      %s683 = int_to_ptr.hbm [resolvable:$true] %s682
      %685 = dma.vmem_to_hbm [thread:$0]  %s681, 128, %s683, [#allocation11]
    $region47: #{tpu_custom_call.1} parent=1 // pred_fallthru
      _
    // Predicated region
    $region48: #{tpu_custom_call.1} parent=1 // pred_check
      _
    $region49: #{tpu_custom_call.1} parent=1 // pred_check_branch
      %687 = sbr.rel (0) target = $region51
    $region50: #{tpu_custom_call.1} parent=1 // pred_region
      %689 = dma.done [#allocation5], 512
    $region51: #{tpu_custom_call.1} parent=1 // pred_fallthru
      _
    // Predicated region
    $region52: #{tpu_custom_call.1} parent=1 // pred_check
      _
    $region53: #{tpu_custom_call.1} parent=1 // pred_check_branch
      %691 = sbr.rel (0) target = $region55
    $region54: #{tpu_custom_call.1} parent=1 // pred_region
      %693 = dma.done [#allocation11], 128
    $region55: #{tpu_custom_call.1} parent=1 // pred_fallthru
      _
    %694 = vsyncpa [#allocation4], 1
    %695 = vsyncpa [#allocation7], 1
    %696 = vsyncpa [#allocation5], 1
    %697 = vsyncpa [#allocation11], 1

</llo_original>
